<compile_context>
chip_gen: v5e
topology: v5e:2x2
jax: 0.10.0
libtpu: 0.0.40
codegen_flags: <defaults>
</compile_context>

<pallas_src>
import jax
import jax.numpy as jnp
import numpy as np
from jax.experimental import pallas as pl
from jax.experimental.pallas import tpu as pltpu


def _round_up(x: int, m: int) -> int:
    return (x + m - 1) // m * m


def _make_resmlp_kernel(n_pre, n_post, in_pad, mid_pad, out_pad, d_pad, mm_dtype):
    """Fused ResMLP kernel for a fixed layer configuration (transposed layout)."""

    def kernel(x_ref, w_ref, b_ref, o_ref):
        # x_ref : [in_pad, tile_n]     (points on lanes)
        # w_ref : [L, d_pad, d_pad]    (PyTorch [out, in] orientation, padded, mm_dtype)
        # b_ref : [L, d_pad, 1]        (f32, broadcast along lanes)
        # o_ref : [out_pad, tile_n]

        def dense(h, layer, k, relu):
            # h: [*, tile_n] f32; contract over the first k feature rows.
            w = w_ref[layer]                      # [d_pad, d_pad], mm_dtype
            if k < d_pad:
                w = w[:, :k]
            hk = h if h.shape[0] == k else h[:k]
            z = jnp.dot(w, hk.astype(mm_dtype),
                        preferred_element_type=jnp.float32)   # MXU, f32 acc
            z = z + b_ref[layer]                  # [d_pad, 1] -> lane broadcast, f32
            if relu:
                z = jnp.maximum(z, 0.0)           # VPU, f32
            return z                              # [d_pad, tile_n] f32

        h = x_ref[...].astype(jnp.float32)        # [in_pad, tile_n]
        layer = 0

        # ---- pre_res: n_pre x (Linear + ReLU) ----
        h = dense(h, layer, in_pad, relu=True)
        layer += 1
        for _ in range(1, n_pre):
            h = dense(h, layer, mid_pad, relu=True)
            layer += 1

        # ---- res branch: Linear + ReLU, then residual add (f32) ----
        h = h + dense(h, layer, mid_pad, relu=True)
        layer += 1

        # ---- post_res: (n_post - 1) x (Linear + ReLU), then final Linear ----
        for _ in range(1, n_post):
            h = dense(h, layer, mid_pad, relu=True)
            layer += 1
        h = dense(h, layer, mid_pad, relu=False)

        o_ref[...] = h[:out_pad].astype(o_ref.dtype)

    return kernel


def res_mlp_forward(x, params, *, n_pre, n_post, internal_size, out_size,
                    tile_n=512, mm_dtype=jnp.bfloat16):
    """x: [N, in_size]. params: list of (W [out, in], b [out]) in forward order."""
    N, in_size = x.shape
    L = len(params)
    assert L == n_pre + n_post + 1

    in_pad = _round_up(in_size, 8)
    out_pad = _round_up(out_size, 8)
    mid_pad = _round_up(internal_size, 8)
    d_pad = max(in_pad, out_pad, mid_pad)
    n_pad = _round_up(N, tile_n)

    # --- wrapper-side layout plumbing (cheap): transpose + zero-pad ---
    xt = jnp.zeros((in_pad, n_pad), jnp.float32)
    xt = xt.at[:in_size, :N].set(x.T.astype(jnp.float32))

    wp = jnp.zeros((L, d_pad, d_pad), mm_dtype)       # bf16 resident weights
    bp = jnp.zeros((L, d_pad, 1), jnp.float32)        # f32 biases (column vectors)
    for l, (w, b) in enumerate(params):
        o, i = w.shape
        wp = wp.at[l, :o, :i].set(w.astype(mm_dtype))
        bp = bp.at[l, :o, 0].set(b.astype(jnp.float32))

    kernel = _make_resmlp_kernel(n_pre, n_post, in_pad, mid_pad, out_pad,
                                 d_pad, mm_dtype)

    grid = (n_pad // tile_n,)
    in_specs = [
        pl.BlockSpec((in_pad, tile_n), lambda i: (0, i)),      # x tile
        pl.BlockSpec((L, d_pad, d_pad), lambda i: (0, 0, 0)),  # all weights, resident
        pl.BlockSpec((L, d_pad, 1), lambda i: (0, 0, 0)),      # all biases, resident
    ]
    out_spec = pl.BlockSpec((out_pad, tile_n), lambda i: (0, i))

    # VMEM budget: resident weights/biases + double-buffered x/out tiles + live
    # activations, with headroom; clamped to v7x's 64 MiB physical VMEM.
    mm_bytes = jnp.dtype(mm_dtype).itemsize
    est = (2 * in_pad * tile_n * 4
           + 2 * out_pad * tile_n * 4
           + 2 * L * d_pad * d_pad * mm_bytes
           + 2 * L * d_pad * 128 * 4
           + 8 * d_pad * tile_n * 4)
    vmem_limit = int(min(max(4 * est, 32 * 2 ** 20), 64 * 2 ** 20))

    fn = pl.pallas_call(
        kernel,
        out_shape=jax.ShapeDtypeStruct((out_pad, n_pad), x.dtype),
        grid_spec=pltpu.PrefetchScalarGridSpec(
            num_scalar_prefetch=0,
            grid=grid,
            in_specs=in_specs,
            out_specs=out_spec,
        ),
        compiler_params=pltpu.CompilerParams(
            dimension_semantics=("parallel",),
            vmem_limit_bytes=vmem_limit,
        ),
    )
    y_t = fn(xt, wp, bp)                    # [out_pad, n_pad]
    return y_t[:out_size, :N].T             # back to natural [N, out_size]


def init_resmlp_params(key, in_size, out_size, internal_size, n_layers):
    """PyTorch-style init. Returns (params, n_pre, n_post); params are
    (W [out, in], b [out]) in forward order: pre_res, res, post_res."""
    assert n_layers >= 3
    n_pre = (n_layers - 1) // 2
    n_post = n_layers - n_pre - 1

    dims = [(in_size, internal_size)]
    dims += [(internal_size, internal_size)] * (n_pre - 1)
    dims += [(internal_size, internal_size)]                 # res layer
    dims += [(internal_size, internal_size)] * (n_post - 1)
    dims += [(internal_size, out_size)]                      # final layer

    params = []
    for fan_in, fan_out in dims:
        key, kw, kb = jax.random.split(key, 3)
        bound = 1.0 / np.sqrt(fan_in)
        w = jax.random.uniform(kw, (fan_out, fan_in), jnp.float32,
                               minval=-bound, maxval=bound)  # PyTorch [out, in]
        b = jax.random.uniform(kb, (fan_out,), jnp.float32,
                               minval=-bound, maxval=bound)
        params.append((w, b))
    return params, n_pre, n_post


def res_mlp_reference(x, params, *, n_pre, n_post, mm_dtype=jnp.bfloat16):
    """Pure-JAX reference mirroring the PyTorch forward (and the kernel's
    bf16-matmul / f32-accumulate precision)."""
    def lin(h, p):
        w, b = p  # w: [out, in]
        return jnp.dot(h.astype(mm_dtype), w.T.astype(mm_dtype),
                       preferred_element_type=jnp.float32) + b

    h = x.astype(jnp.float32)
    idx = 0
    for _ in range(n_pre):
        h = jax.nn.relu(lin(h, params[idx])); idx += 1
    h = h + jax.nn.relu(lin(h, params[idx])); idx += 1
    for _ in range(n_post - 1):
        h = jax.nn.relu(lin(h, params[idx])); idx += 1
    return lin(h, params[idx])


if __name__ == "__main__":
    # INR-flavoured small shapes: 4096 coordinate points of dim 3 -> 8 outputs.
    # tile_n=512 -> grid of 8 steps (keeps both v7x TCs busy, amortizes per-step
    # overhead) while everything stays tiny.
    N = 4096
    in_size = 3
    out_size = 8
    internal_size = 32
    n_layers = 5  # n_pre = 2, n_post = 2

    # TODO(synk): activate_fn is configurable in the PyTorch module; kernel hard-codes ReLU.

    key = jax.random.PRNGKey(0)
    key, kx = jax.random.split(key)
    x = jax.random.normal(kx, (N, in_size), jnp.float32)

    params, n_pre, n_post = init_resmlp_params(
        key, in_size, out_size, internal_size, n_layers
    )

    y = res_mlp_forward(
        x, params, n_pre=n_pre, n_post=n_post,
        internal_size=internal_size, out_size=out_size,
        tile_n=512, mm_dtype=jnp.bfloat16,
    )
    y = jax.block_until_ready(y)

    y_ref = res_mlp_reference(x, params, n_pre=n_pre, n_post=n_post,
                              mm_dtype=jnp.bfloat16)
    assert y.shape == (N, out_size)
    max_err = float(jnp.max(jnp.abs(y - y_ref)))
    assert jnp.allclose(y, y_ref, atol=1e-4, rtol=1e-4), (
        f"mismatch vs JAX reference, max abs err {max_err}"
    )

    print("KERNEL_OK")
</pallas_src>

<mosaic_0001>
module attributes {stable_mosaic.version = 11 : i64} {
  func.func @kernel(%arg0: i32, %arg1: memref<8x512xf32, #tpu.memory_space<vmem>>, %arg2: memref<5x32x32xbf16, #tpu.memory_space<vmem>>, %arg3: memref<5x32x1xf32, #tpu.memory_space<vmem>>, %arg4: memref<8x512xf32, #tpu.memory_space<vmem>>) attributes {dimension_semantics = [#tpu.dimension_semantics<parallel>], iteration_bounds = array<i64: 8>, scalar_prefetch = 0 : i64, scratch_operands = 0 : i64, tpu.core_type = #tpu.core_type<tc>, window_params = [{transform_indices = @transform_0, window_bounds = array<i64: 8, 512>}, {pipeline_mode = #tpu.pipeline_mode<synchronous>, transform_indices = @transform_1, window_bounds = array<i64: 5, 32, 32>}, {pipeline_mode = #tpu.pipeline_mode<synchronous>, transform_indices = @transform_2, window_bounds = array<i64: 5, 32, 1>}, {transform_indices = @transform_3, window_bounds = array<i64: 8, 512>}]} {
    %c0 = arith.constant 0 : index
    %c0_0 = arith.constant 0 : index
    %0 = vector.load %arg1[%c0, %c0_0] : memref<8x512xf32, #tpu.memory_space<vmem>>, vector<8x512xf32>
    %c0_1 = arith.constant 0 : index
    %c0_2 = arith.constant 0 : index
    %c0_3 = arith.constant 0 : index
    %1 = vector.load %arg2[%c0_1, %c0_2, %c0_3] : memref<5x32x32xbf16, #tpu.memory_space<vmem>>, vector<1x32x32xbf16>
    %2 = vector.shape_cast %1 : vector<1x32x32xbf16> to vector<32x32xbf16>
    %3 = vector.extract_strided_slice %2 {offsets = [0, 0], sizes = [32, 8], strides = [1, 1]} : vector<32x32xbf16> to vector<32x8xbf16>
    %4 = arith.truncf %0 : vector<8x512xf32> to vector<8x512xbf16>
    %cst = arith.constant dense<0.000000e+00> : vector<32x512xf32>
    %5 = tpu.matmul %3, %4, %cst {dimension_numbers = #tpu.dot_dimension_numbers<[1], [0], [0], [1], [0, 0, 1, 1], [], []>} : vector<32x8xbf16>, vector<8x512xbf16>, vector<32x512xf32> -> vector<32x512xf32>
    %c0_4 = arith.constant 0 : index
    %c0_5 = arith.constant 0 : index
    %c0_6 = arith.constant 0 : index
    %6 = vector.load %arg3[%c0_4, %c0_5, %c0_6] : memref<5x32x1xf32, #tpu.memory_space<vmem>>, vector<1x32x1xf32>
    %7 = vector.shape_cast %6 : vector<1x32x1xf32> to vector<32x1xf32>
    %8 = vector.broadcast %7 : vector<32x1xf32> to vector<32x512xf32>
    %9 = arith.addf %5, %8 : vector<32x512xf32>
    %cst_7 = arith.constant 0.000000e+00 : f32
    %10 = vector.broadcast %cst_7 : f32 to vector<32x512xf32>
    %11 = arith.maximumf %9, %10 : vector<32x512xf32>
    %c1 = arith.constant 1 : index
    %c0_8 = arith.constant 0 : index
    %c0_9 = arith.constant 0 : index
    %12 = vector.load %arg2[%c1, %c0_8, %c0_9] : memref<5x32x32xbf16, #tpu.memory_space<vmem>>, vector<1x32x32xbf16>
    %13 = vector.shape_cast %12 : vector<1x32x32xbf16> to vector<32x32xbf16>
    %14 = arith.truncf %11 : vector<32x512xf32> to vector<32x512xbf16>
    %cst_10 = arith.constant dense<0.000000e+00> : vector<32x512xf32>
    %15 = tpu.matmul %13, %14, %cst_10 {dimension_numbers = #tpu.dot_dimension_numbers<[1], [0], [0], [1], [0, 0, 1, 1], [], []>} : vector<32x32xbf16>, vector<32x512xbf16>, vector<32x512xf32> -> vector<32x512xf32>
    %c1_11 = arith.constant 1 : index
    %c0_12 = arith.constant 0 : index
    %c0_13 = arith.constant 0 : index
    %16 = vector.load %arg3[%c1_11, %c0_12, %c0_13] : memref<5x32x1xf32, #tpu.memory_space<vmem>>, vector<1x32x1xf32>
    %17 = vector.shape_cast %16 : vector<1x32x1xf32> to vector<32x1xf32>
    %18 = vector.broadcast %17 : vector<32x1xf32> to vector<32x512xf32>
    %19 = arith.addf %15, %18 : vector<32x512xf32>
    %cst_14 = arith.constant 0.000000e+00 : f32
    %20 = vector.broadcast %cst_14 : f32 to vector<32x512xf32>
    %21 = arith.maximumf %19, %20 : vector<32x512xf32>
    %c2 = arith.constant 2 : index
    %c0_15 = arith.constant 0 : index
    %c0_16 = arith.constant 0 : index
    %22 = vector.load %arg2[%c2, %c0_15, %c0_16] : memref<5x32x32xbf16, #tpu.memory_space<vmem>>, vector<1x32x32xbf16>
    %23 = vector.shape_cast %22 : vector<1x32x32xbf16> to vector<32x32xbf16>
    %24 = arith.truncf %21 : vector<32x512xf32> to vector<32x512xbf16>
    %cst_17 = arith.constant dense<0.000000e+00> : vector<32x512xf32>
    %25 = tpu.matmul %23, %24, %cst_17 {dimension_numbers = #tpu.dot_dimension_numbers<[1], [0], [0], [1], [0, 0, 1, 1], [], []>} : vector<32x32xbf16>, vector<32x512xbf16>, vector<32x512xf32> -> vector<32x512xf32>
    %c2_18 = arith.constant 2 : index
    %c0_19 = arith.constant 0 : index
    %c0_20 = arith.constant 0 : index
    %26 = vector.load %arg3[%c2_18, %c0_19, %c0_20] : memref<5x32x1xf32, #tpu.memory_space<vmem>>, vector<1x32x1xf32>
    %27 = vector.shape_cast %26 : vector<1x32x1xf32> to vector<32x1xf32>
    %28 = vector.broadcast %27 : vector<32x1xf32> to vector<32x512xf32>
    %29 = arith.addf %25, %28 : vector<32x512xf32>
    %cst_21 = arith.constant 0.000000e+00 : f32
    %30 = vector.broadcast %cst_21 : f32 to vector<32x512xf32>
    %31 = arith.maximumf %29, %30 : vector<32x512xf32>
    %32 = arith.addf %21, %31 : vector<32x512xf32>
    %c3 = arith.constant 3 : index
    %c0_22 = arith.constant 0 : index
    %c0_23 = arith.constant 0 : index
    %33 = vector.load %arg2[%c3, %c0_22, %c0_23] : memref<5x32x32xbf16, #tpu.memory_space<vmem>>, vector<1x32x32xbf16>
    %34 = vector.shape_cast %33 : vector<1x32x32xbf16> to vector<32x32xbf16>
    %35 = arith.truncf %32 : vector<32x512xf32> to vector<32x512xbf16>
    %cst_24 = arith.constant dense<0.000000e+00> : vector<32x512xf32>
    %36 = tpu.matmul %34, %35, %cst_24 {dimension_numbers = #tpu.dot_dimension_numbers<[1], [0], [0], [1], [0, 0, 1, 1], [], []>} : vector<32x32xbf16>, vector<32x512xbf16>, vector<32x512xf32> -> vector<32x512xf32>
    %c3_25 = arith.constant 3 : index
    %c0_26 = arith.constant 0 : index
    %c0_27 = arith.constant 0 : index
    %37 = vector.load %arg3[%c3_25, %c0_26, %c0_27] : memref<5x32x1xf32, #tpu.memory_space<vmem>>, vector<1x32x1xf32>
    %38 = vector.shape_cast %37 : vector<1x32x1xf32> to vector<32x1xf32>
    %39 = vector.broadcast %38 : vector<32x1xf32> to vector<32x512xf32>
    %40 = arith.addf %36, %39 : vector<32x512xf32>
    %cst_28 = arith.constant 0.000000e+00 : f32
    %41 = vector.broadcast %cst_28 : f32 to vector<32x512xf32>
    %42 = arith.maximumf %40, %41 : vector<32x512xf32>
    %c4 = arith.constant 4 : index
    %c0_29 = arith.constant 0 : index
    %c0_30 = arith.constant 0 : index
    %43 = vector.load %arg2[%c4, %c0_29, %c0_30] : memref<5x32x32xbf16, #tpu.memory_space<vmem>>, vector<1x32x32xbf16>
    %44 = vector.shape_cast %43 : vector<1x32x32xbf16> to vector<32x32xbf16>
    %45 = arith.truncf %42 : vector<32x512xf32> to vector<32x512xbf16>
    %cst_31 = arith.constant dense<0.000000e+00> : vector<32x512xf32>
    %46 = tpu.matmul %44, %45, %cst_31 {dimension_numbers = #tpu.dot_dimension_numbers<[1], [0], [0], [1], [0, 0, 1, 1], [], []>} : vector<32x32xbf16>, vector<32x512xbf16>, vector<32x512xf32> -> vector<32x512xf32>
    %c4_32 = arith.constant 4 : index
    %c0_33 = arith.constant 0 : index
    %c0_34 = arith.constant 0 : index
    %47 = vector.load %arg3[%c4_32, %c0_33, %c0_34] : memref<5x32x1xf32, #tpu.memory_space<vmem>>, vector<1x32x1xf32>
    %48 = vector.shape_cast %47 : vector<1x32x1xf32> to vector<32x1xf32>
    %49 = vector.broadcast %48 : vector<32x1xf32> to vector<32x512xf32>
    %50 = arith.addf %46, %49 : vector<32x512xf32>
    %51 = vector.extract_strided_slice %50 {offsets = [0, 0], sizes = [8, 512], strides = [1, 1]} : vector<32x512xf32> to vector<8x512xf32>
    %c0_35 = arith.constant 0 : index
    %c0_36 = arith.constant 0 : index
    %52 = vector.load %arg4[%c0_35, %c0_36] : memref<8x512xf32, #tpu.memory_space<vmem>>, vector<8x512xf32>
    tpu.vector_store %arg4[%c0_35, %c0_36], %51 {strides = array<i32>} : memref<8x512xf32, #tpu.memory_space<vmem>>, vector<8x512xf32>,
    return
  }
  func.func @transform_0(%arg0: i32) -> (i32, i32) {
    %c0_i32 = arith.constant 0 : i32
    %c0_i32_0 = arith.constant 0 : i32
    return %c0_i32, %arg0 : i32, i32
  }
  func.func @transform_1(%arg0: i32) -> (i32, i32, i32) {
    %c0_i32 = arith.constant 0 : i32
    %c0_i32_0 = arith.constant 0 : i32
    %c0_i32_1 = arith.constant 0 : i32
    %c0_i32_2 = arith.constant 0 : i32
    return %c0_i32, %c0_i32_0, %c0_i32_1 : i32, i32, i32
  }
  func.func @transform_2(%arg0: i32) -> (i32, i32, i32) {
    %c0_i32 = arith.constant 0 : i32
    %c0_i32_0 = arith.constant 0 : i32
    %c0_i32_1 = arith.constant 0 : i32
    %c0_i32_2 = arith.constant 0 : i32
    return %c0_i32, %c0_i32_0, %c0_i32_1 : i32, i32, i32
  }
  func.func @transform_3(%arg0: i32) -> (i32, i32) {
    %c0_i32 = arith.constant 0 : i32
    %c0_i32_0 = arith.constant 0 : i32
    return %c0_i32, %arg0 : i32, i32
  }
}

</mosaic_0001>

<llo_original>
// kernel: tpu_custom_call.1
$region0: #{tpu_custom_call.1}
  #allocation0 [shape = 'u32[]', space=smem, size = 0x4, offset = 0x4, fixed_abs, tag = 'smem constant byte address 0x4 - core index']
  #allocation1 [shape = 'u32[72,128]{1,0:T(1,128)}', space=vmem, size = 0x9000, scoped, tag = 'internal scratch']
  %s0 = inlined_call_operand.hbm [shape: f32[8,4096], index: 0, kind: input, shape index: {}]
  %s1 = inlined_call_operand.vmem [shape: bf16[5,32,32], index: 1, kind: input, shape index: {}]
  %s2 = inlined_call_operand.vmem [shape: f32[5,32,1], index: 2, kind: input, shape index: {}]
  %s3 = inlined_call_operand.hbm [shape: f32[8,4096], index: 3, kind: output, shape index: {}]
  %s4 = sld [smem:[#allocation0]]
  $region49: #{tpu_custom_call.1} parent=0
    _
  %s6 = ssub.s32 1, %s4
  %s7 = scalar_select 0, %s6, %s4
  $region1: #{tpu_custom_call.1} parent=0
    #allocation2 [shape = 'u8[32768]{0}', space=vmem, size = 0x8000, scoped, tag = 'input window, operand 0']
    #allocation3 [shape = 's32[2]{0}', space=sflag, size = 0x8, scoped, tag = 'scoped memory for tpu_custom_call.1']
    #allocation4 [shape = 's32[2]{0}', space=sflag, size = 0x8, scoped, tag = 'scoped memory for tpu_custom_call.1']
    #allocation5 [shape = 'u8[32768]{0}', space=vmem, size = 0x8000, scoped, tag = 'output window, operand 0']
    %8 = vsyncpa [#allocation3], 0
    %s9 = scalar_lea.sflag [#allocation3], 1
    %10 = vsyncpa %s9, 0
    %11 = vsyncpa [#allocation4], 0
    %s12 = scalar_lea.sflag [#allocation4], 1
    %13 = vsyncpa %s12, 0
    loop: start=0, step=1, limit=10
    $region2: #{tpu_custom_call.1} parent=1 // loop_pre_header
      _
    $region3: #{tpu_custom_call.1} parent=1 // loop_header
      %s15 = sphi 0, %s19
      %p16 = scmp.ge.s32.totalorder %s15, 10
      %s25 = sphi 0, %s27
      %s28 = sphi 0, %s25
      %s29 = sphi 0, %s28
      %s45 = sphi 0, %s29
      %s49 = sphi 0, %s49
      %s51 = sphi 0, %s49
      %s52 = sphi 0, %s51
      %s66 = sphi 0, %s52
      %s70 = sphi 0, %s70
      %s72 = sphi 0, %s70
      %s73 = sphi 0, %s72
      %s87 = sphi 0, %s73
      %s93 = sphi 0, %s95
      %s96 = sphi 0, %s93
      %s97 = sphi 0, %s96
      %s113 = sphi 0, %s97
    $region4: #{tpu_custom_call.1} parent=1 // loop_header_branch
      %18 = sbr.rel (%p16) target = $region8
    $region5: #{tpu_custom_call.1} parent=1 // loop_body
      %s20 = ssub.s32 %s15, 1
      %s21 = ssub.s32 %s15, 2
      %s22 = sadd.s32 %s15, 1
      %s23 = ssub.s32 %s15, %s22
      %p24 = scmp.eq.s32.totalorder %s23, 0
      %s26 = sadd.s32 %s25, 1
      %s27 = scalar_select %p24, %s25, %s26
      %p30 = pneg %p24
      %p31 = scmp.eq.s32.totalorder %s15, 7
      %p32 = por %p30, %p31
      %p33 = scmp.ne.s32.totalorder %s25, %s28
      %p34 = scmp.eq.s32.totalorder %s15, 0
      %p35 = por %p33, %p34
      %p36 = scmp.ne.s32.totalorder %s25, %s28
      %p37 = scmp.eq.s32.totalorder %s20, 7
      %p38 = por %p36, %p37
      %p39 = scmp.ne.s32.totalorder %s28, %s29
      %p40 = scmp.eq.s32.totalorder %s20, 0
      %p41 = por %p39, %p40
      %p42 = scmp.ne.s32.totalorder %s28, %s29
      %p43 = scmp.eq.s32.totalorder %s21, 7
      %p44 = por %p42, %p43
      %p46 = scmp.ne.s32.totalorder %s29, %s45
      %p47 = scmp.eq.s32.totalorder %s21, 0
      %p48 = por %p46, %p47
      %s50 = sadd.s32 %s49, 1
      %p53 = scmp.eq.s32.totalorder %s15, 7
      %p54 = scmp.ne.s32.totalorder %s49, %s51
      %p55 = scmp.eq.s32.totalorder %s15, 0
      %p56 = por %p54, %p55
      %p57 = scmp.ne.s32.totalorder %s49, %s51
      %p58 = scmp.eq.s32.totalorder %s20, 7
      %p59 = por %p57, %p58
      %p60 = scmp.ne.s32.totalorder %s51, %s52
      %p61 = scmp.eq.s32.totalorder %s20, 0
      %p62 = por %p60, %p61
      %p63 = scmp.ne.s32.totalorder %s51, %s52
      %p64 = scmp.eq.s32.totalorder %s21, 7
      %p65 = por %p63, %p64
      %p67 = scmp.ne.s32.totalorder %s52, %s66
      %p68 = scmp.eq.s32.totalorder %s21, 0
      %p69 = por %p67, %p68
      %s71 = sadd.s32 %s70, 1
      %p74 = scmp.eq.s32.totalorder %s15, 7
      %p75 = scmp.ne.s32.totalorder %s70, %s72
      %p76 = scmp.eq.s32.totalorder %s15, 0
      %p77 = por %p75, %p76
      %p78 = scmp.ne.s32.totalorder %s70, %s72
      %p79 = scmp.eq.s32.totalorder %s20, 7
      %p80 = por %p78, %p79
      %p81 = scmp.ne.s32.totalorder %s72, %s73
      %p82 = scmp.eq.s32.totalorder %s20, 0
      %p83 = por %p81, %p82
      %p84 = scmp.ne.s32.totalorder %s72, %s73
      %p85 = scmp.eq.s32.totalorder %s21, 7
      %p86 = por %p84, %p85
      %p88 = scmp.ne.s32.totalorder %s73, %s87
      %p89 = scmp.eq.s32.totalorder %s21, 0
      %p90 = por %p88, %p89
      %s91 = ssub.s32 %s15, %s22
      %p92 = scmp.eq.s32.totalorder %s91, 0
      %s94 = sadd.s32 %s93, 1
      %s95 = scalar_select %p92, %s93, %s94
      %p98 = pneg %p92
      %p99 = scmp.eq.s32.totalorder %s15, 7
      %p100 = por %p98, %p99
      %p101 = scmp.ne.s32.totalorder %s93, %s96
      %p102 = scmp.eq.s32.totalorder %s15, 0
      %p103 = por %p101, %p102
      %p104 = scmp.ne.s32.totalorder %s93, %s96
      %p105 = scmp.eq.s32.totalorder %s20, 7
      %p106 = por %p104, %p105
      %p107 = scmp.ne.s32.totalorder %s96, %s97
      %p108 = scmp.eq.s32.totalorder %s20, 0
      %p109 = por %p107, %p108
      %p110 = scmp.ne.s32.totalorder %s96, %s97
      %p111 = scmp.eq.s32.totalorder %s21, 7
      %p112 = por %p110, %p111
      %p114 = scmp.ne.s32.totalorder %s97, %s113
      %p115 = scmp.eq.s32.totalorder %s21, 0
      %p116 = por %p114, %p115
      %p117 = scmp.le.s32.totalorder 1, %s15
      %p118 = scmp.lt.s32.totalorder %s15, 9
      %p119 = pnand %p117, %p118
      %p120 = pneg %p119
      // Predicated region
      $region9: #{tpu_custom_call.1} parent=5 // pred_check
        _
      $region10: #{tpu_custom_call.1} parent=5 // pred_check_branch
        %122 = sbr.rel (%p119) target = $region12
      $region11: #{tpu_custom_call.1} parent=5 // pred_region
        %s123 = ssub.s32 %s15, 1
        // Predicated region
        $region13: #{tpu_custom_call.1} parent=11 // pred_check
          %p124 = pneg %p62
        $region14: #{tpu_custom_call.1} parent=11 // pred_check_branch
          %126 = sbr.rel (%p124) target = $region16
        $region15: #{tpu_custom_call.1} parent=11 // pred_region
          _
        $region16: #{tpu_custom_call.1} parent=11 // pred_fallthru
          _
        // Predicated region
        $region17: #{tpu_custom_call.1} parent=11 // pred_check
          %p127 = pneg %p83
        $region18: #{tpu_custom_call.1} parent=11 // pred_check_branch
          %129 = sbr.rel (%p127) target = $region20
        $region19: #{tpu_custom_call.1} parent=11 // pred_region
          _
        $region20: #{tpu_custom_call.1} parent=11 // pred_fallthru
          _
      $region12: #{tpu_custom_call.1} parent=5 // pred_fallthru
        _
      %p130 = scmp.lt.s32.totalorder %s15, 8
      // Predicated region
      $region21: #{tpu_custom_call.1} parent=5 // pred_check
        %p131 = pneg %p130
      $region22: #{tpu_custom_call.1} parent=5 // pred_check_branch
        %133 = sbr.rel (%p131) target = $region24
      $region23: #{tpu_custom_call.1} parent=5 // pred_region
        // Predicated region
        $region25: #{tpu_custom_call.1} parent=23 // pred_check
          %p134 = pneg %p35
        $region26: #{tpu_custom_call.1} parent=23 // pred_check_branch
          %136 = sbr.rel (%p134) target = $region28
        $region27: #{tpu_custom_call.1} parent=23 // pred_region
          %s137 = sand.u32 %s25, 1
          %s138 = scalar_lea.sflag [#allocation3], %s137
          %s139 = sand.u32 %s25, 1
          %s140 = smul.addr %s139, 32
          %s141 = scalar_lea.vmem [#allocation2], %s140
          %s142 = smul.u32 4, %s15
          %144 = vsyncadd %s138, 0
          %s145 = smul.addr %s142, 8
          %s146 = scalar_lea.hbm %s0, %s145
          %s148 = sshll.u32 %s146, 4
          %s149 = int_to_ptr.hbm [resolvable:$true] %s148
          %s150 = sshll.u32 %s141, 4
          %s151 = int_to_ptr.vmem [resolvable:$true] %s150
          %153 = dma.hbm_to_vmem [thread:$0]  %s149, 512, %s151, %s138
        $region28: #{tpu_custom_call.1} parent=23 // pred_fallthru
          _
      $region24: #{tpu_custom_call.1} parent=5 // pred_fallthru
        _
      %p154 = scmp.le.s32.totalorder 1, %s15
      %p155 = scmp.lt.s32.totalorder %s15, 9
      %p156 = pnand %p154, %p155
      %p157 = pneg %p156
      // Predicated region
      $region29: #{tpu_custom_call.1} parent=5 // pred_check
        _
      $region30: #{tpu_custom_call.1} parent=5 // pred_check_branch
        %159 = sbr.rel (%p156) target = $region32
      $region31: #{tpu_custom_call.1} parent=5 // pred_region
        %s160 = ssub.s32 %s15, 1
        %s161 = sand.u32 %s28, 1
        %s162 = scalar_lea.sflag [#allocation3], %s161
        %s163 = sand.u32 %s28, 1
        %s164 = smul.addr %s163, 32
        %s165 = scalar_lea.vmem [#allocation2], %s164
        // Predicated region
        $region33: #{tpu_custom_call.1} parent=31 // pred_check
          %p166 = pneg %p41
        $region34: #{tpu_custom_call.1} parent=31 // pred_check_branch
          %168 = sbr.rel (%p166) target = $region36
        $region35: #{tpu_custom_call.1} parent=31 // pred_region
          %170 = dma.done %s162, 512
        $region36: #{tpu_custom_call.1} parent=31 // pred_fallthru
          _
        %s171 = sand.u32 %s28, 1
        %s172 = scalar_lea.sflag [#allocation3], %s171
        %s173 = sand.u32 %s28, 1
        %s174 = smul.addr %s173, 32
        %s175 = scalar_lea.vmem [#allocation2], %s174
        %p176 = pneg %p41
        %p177 = pneg %p38
        %p178 = pneg %p62
        %p179 = pneg %p59
        %p180 = pneg %p83
        %p181 = pneg %p80
        %p182 = pneg %p109
        %p183 = pneg %p106
        %s184 = sand.u32 %s96, 1
        %s185 = scalar_lea.sflag [#allocation4], %s184
        %s186 = sand.u32 %s96, 1
        %s187 = smul.addr %s186, 32
        %s188 = scalar_lea.vmem [#allocation5], %s187
        %s189 = smul.u32 4, %s20
        %s190 = smul.u32 4, %s20
        %v192 = vld [vmem:[%s165] sm:$0xff]
        %v193 = vld [vmem:[%s165 + $0x8] sm:$0xff]
        %v194 = vld [vmem:[%s165 + $0x10] sm:$0xff]
        %v195 = vld [vmem:[%s165 + $0x18] sm:$0xff]
        %v196 = vld [vmem:[%s1] sm:$0xf]
        %v197 = vld [vmem:[%s1 + $0x4] sm:$0xf]
        %v198 = vld [vmem:[%s1 + $0x8] sm:$0xf]
        %v199 = vld [vmem:[%s1 + $0xc] sm:$0xf]
        %v200 = vpack.c.bf16 %v192, %v192
        %v201 = vpack.c.bf16 %v193, %v193
        %v202 = vpack.c.bf16 %v194, %v194
        %v203 = vpack.c.bf16 %v195, %v195
        %v204 = vld [vmem:[%s2] sm:$0xff]
        %v205 = vld [vmem:[%s2 + $0x8] sm:$0xff]
        %v206 = vld [vmem:[%s2 + $0x10] sm:$0xff]
        %v207 = vld [vmem:[%s2 + $0x18] sm:$0xff]
        %209 = vset.pattern.permute.xlu0 0
        %210 = vperm.xlu0 %209, %v204
        %v211 = vpop.permute.xlu0 %210
        %214 = vset.pattern.permute.xlu0 0
        %215 = vperm.xlu0 %214, %v205
        %v216 = vpop.permute.xlu0 %215
        %219 = vset.pattern.permute.xlu0 0
        %220 = vperm.xlu0 %219, %v206
        %v221 = vpop.permute.xlu0 %220
        %224 = vset.pattern.permute.xlu0 0
        %225 = vperm.xlu0 %224, %v207
        %v226 = vpop.permute.xlu0 %225
        %v232 = vunpack.c.l.b16 %v196
        %v233 = vunpack.c.l.b16 %v197
        %v234 = vunpack.c.l.b16 %v198
        %v235 = vunpack.c.l.b16 %v199
        %v236 = vpack.c.b16 %v233, %v232
        %v237 = vpack.c.b16 %v235, %v234
        %vm238 = vcmask 64512
        %v240 = vsel %vm238, %v236, 0
        %v243 = vsel %vm238, %v237, 0
        %vm245 = vcmask 1043456
        %v247 = vsel %vm245, %v200, 0
        %v250 = vsel %vm245, %v201, 0
        %v253 = vsel %vm245, %v202, 0
        %v256 = vsel %vm245, %v203, 0
        %258 = vmatpush.bf16.msra.mxu0 0
        %259 = vmatpush.bf16.msra.mxu0 0
        %260 = vmatpush.bf16.msra.mxu0 0
        %261 = vmatpush.bf16.msra.mxu0 0
        %262 = vmatpush.bf16.msra.mxu0 0
        %263 = vmatpush.bf16.msra.mxu0 0
        %264 = vmatpush.bf16.msra.mxu0 0
        %265 = vmatpush.bf16.msra.mxu0 %v247
        %266 = vmatmul.bf16.gmra.mxu0 %v240
        %v267 = vpop.f32.mrf.mxu0
        %v268 = vadd.f32 %v211, %v267
        %v269 = vpop.f32.mrf.mxu0
        %v270 = vadd.f32 %v216, %v269
        %271 = vmatmul.bf16.gmra.mxu0 %v243
        %v272 = vpop.f32.mrf.mxu0
        %v273 = vadd.f32 %v221, %v272
        %v274 = vpop.f32.mrf.mxu0
        %v275 = vadd.f32 %v226, %v274
        %276 = vdwg.mxu0
        %277 = vmatpush.bf16.msra.mxu0 0
        %278 = vmatpush.bf16.msra.mxu0 0
        %279 = vmatpush.bf16.msra.mxu0 0
        %280 = vmatpush.bf16.msra.mxu0 0
        %281 = vmatpush.bf16.msra.mxu0 0
        %282 = vmatpush.bf16.msra.mxu0 0
        %283 = vmatpush.bf16.msra.mxu0 0
        %284 = vmatpush.bf16.msra.mxu0 %v250
        %285 = vmatmul.bf16.gmra.mxu0 %v240
        %v286 = vpop.f32.mrf.mxu0
        %v287 = vadd.f32 %v211, %v286
        %v288 = vpop.f32.mrf.mxu0
        %v289 = vadd.f32 %v216, %v288
        %290 = vmatmul.bf16.gmra.mxu0 %v243
        %v291 = vpop.f32.mrf.mxu0
        %v292 = vadd.f32 %v221, %v291
        %v293 = vpop.f32.mrf.mxu0
        %v294 = vadd.f32 %v226, %v293
        %295 = vdwg.mxu0
        %296 = vmatpush.bf16.msra.mxu0 0
        %297 = vmatpush.bf16.msra.mxu0 0
        %298 = vmatpush.bf16.msra.mxu0 0
        %299 = vmatpush.bf16.msra.mxu0 0
        %300 = vmatpush.bf16.msra.mxu0 0
        %301 = vmatpush.bf16.msra.mxu0 0
        %302 = vmatpush.bf16.msra.mxu0 0
        %303 = vmatpush.bf16.msra.mxu0 %v253
        %304 = vmatmul.bf16.gmra.mxu0 %v240
        %v305 = vpop.f32.mrf.mxu0
        %v306 = vadd.f32 %v211, %v305
        %v307 = vpop.f32.mrf.mxu0
        %v308 = vadd.f32 %v216, %v307
        %309 = vmatmul.bf16.gmra.mxu0 %v243
        %v310 = vpop.f32.mrf.mxu0
        %v311 = vadd.f32 %v221, %v310
        %v312 = vpop.f32.mrf.mxu0
        %v313 = vadd.f32 %v226, %v312
        %314 = vdwg.mxu0
        %315 = vmatpush.bf16.msra.mxu0 0
        %316 = vmatpush.bf16.msra.mxu0 0
        %317 = vmatpush.bf16.msra.mxu0 0
        %318 = vmatpush.bf16.msra.mxu0 0
        %319 = vmatpush.bf16.msra.mxu0 0
        %320 = vmatpush.bf16.msra.mxu0 0
        %321 = vmatpush.bf16.msra.mxu0 0
        %322 = vmatpush.bf16.msra.mxu0 %v256
        %323 = vmatmul.bf16.gmra.mxu0 %v240
        %v324 = vpop.f32.mrf.mxu0
        %v325 = vadd.f32 %v211, %v324
        %v326 = vpop.f32.mrf.mxu0
        %v327 = vadd.f32 %v216, %v326
        %328 = vmatmul.bf16.gmra.mxu0 %v243
        %v329 = vpop.f32.mrf.mxu0
        %v330 = vadd.f32 %v221, %v329
        %v331 = vpop.f32.mrf.mxu0
        %v332 = vadd.f32 %v226, %v331
        %333 = vdwg.mxu0
        %v334 = vmax.f32 %v268, 0.0
        %v335 = vmax.f32 %v287, 0.0
        %v336 = vmax.f32 %v306, 0.0
        %v337 = vmax.f32 %v325, 0.0
        %v338 = vmax.f32 %v270, 0.0
        %v339 = vmax.f32 %v289, 0.0
        %v340 = vmax.f32 %v308, 0.0
        %v341 = vmax.f32 %v327, 0.0
        %v342 = vmax.f32 %v273, 0.0
        %v343 = vmax.f32 %v292, 0.0
        %v344 = vmax.f32 %v311, 0.0
        %v345 = vmax.f32 %v330, 0.0
        %v346 = vmax.f32 %v275, 0.0
        %v347 = vmax.f32 %v294, 0.0
        %v348 = vmax.f32 %v313, 0.0
        %v349 = vmax.f32 %v332, 0.0
        %s350 = scalar_lea.vmem %s1, 16
        %v351 = vld [vmem:[%s350] sm:$0xf]
        %v352 = vld [vmem:[%s350 + $0x4] sm:$0xf]
        %v353 = vld [vmem:[%s350 + $0x8] sm:$0xf]
        %v354 = vld [vmem:[%s350 + $0xc] sm:$0xf]
        %v355 = vpack.c.bf16 %v338, %v334
        %v356 = vpack.c.bf16 %v339, %v335
        %v357 = vpack.c.bf16 %v340, %v336
        %v358 = vpack.c.bf16 %v341, %v337
        %v359 = vpack.c.bf16 %v346, %v342
        %v360 = vpack.c.bf16 %v347, %v343
        %v361 = vpack.c.bf16 %v348, %v344
        %v362 = vpack.c.bf16 %v349, %v345
        %s363 = scalar_lea.vmem %s2, 32
        %v364 = vld [vmem:[%s363] sm:$0xff]
        %v365 = vld [vmem:[%s363 + $0x8] sm:$0xff]
        %v366 = vld [vmem:[%s363 + $0x10] sm:$0xff]
        %v367 = vld [vmem:[%s363 + $0x18] sm:$0xff]
        %369 = vset.pattern.permute.xlu0 0
        %370 = vperm.xlu0 %369, %v364
        %v371 = vpop.permute.xlu0 %370
        %374 = vset.pattern.permute.xlu0 0
        %375 = vperm.xlu0 %374, %v365
        %v376 = vpop.permute.xlu0 %375
        %379 = vset.pattern.permute.xlu0 0
        %380 = vperm.xlu0 %379, %v366
        %v381 = vpop.permute.xlu0 %380
        %384 = vset.pattern.permute.xlu0 0
        %385 = vperm.xlu0 %384, %v367
        %v386 = vpop.permute.xlu0 %385
        %v392 = vunpack.c.l.b16 %v351
        %v393 = vunpack.c.l.b16 %v352
        %v394 = vunpack.c.l.b16 %v353
        %v395 = vunpack.c.l.b16 %v354
        %v396 = vpack.c.b16 %v393, %v392
        %v397 = vpack.c.b16 %v395, %v394
        %vm398 = vcmask 261120
        %v400 = vsel %vm398, %v396, 0
        %v403 = vsel %vm398, %v397, 0
        %405 = vmatpush.bf16.msra.mxu0 0
        %406 = vmatpush.bf16.msra.mxu0 0
        %407 = vmatpush.bf16.msra.mxu0 0
        %408 = vmatpush.bf16.msra.mxu0 0
        %409 = vmatpush.bf16.msra.mxu0 0
        %410 = vmatpush.bf16.msra.mxu0 0
        %411 = vmatpush.bf16.msra.mxu0 %v359
        %412 = vmatpush.bf16.msra.mxu0 %v355
        %413 = vmatmul.bf16.gmra.mxu0 %v400
        %v414 = vpop.f32.mrf.mxu0
        %v415 = vadd.f32 %v371, %v414
        %v416 = vpop.f32.mrf.mxu0
        %v417 = vadd.f32 %v376, %v416
        %418 = vmatmul.bf16.gmra.mxu0 %v403
        %v419 = vpop.f32.mrf.mxu0
        %v420 = vadd.f32 %v381, %v419
        %v421 = vpop.f32.mrf.mxu0
        %v422 = vadd.f32 %v386, %v421
        %423 = vdwg.mxu0
        %424 = vmatpush.bf16.msra.mxu0 0
        %425 = vmatpush.bf16.msra.mxu0 0
        %426 = vmatpush.bf16.msra.mxu0 0
        %427 = vmatpush.bf16.msra.mxu0 0
        %428 = vmatpush.bf16.msra.mxu0 0
        %429 = vmatpush.bf16.msra.mxu0 0
        %430 = vmatpush.bf16.msra.mxu0 %v360
        %431 = vmatpush.bf16.msra.mxu0 %v356
        %432 = vmatmul.bf16.gmra.mxu0 %v400
        %v433 = vpop.f32.mrf.mxu0
        %v434 = vadd.f32 %v371, %v433
        %v435 = vpop.f32.mrf.mxu0
        %v436 = vadd.f32 %v376, %v435
        %437 = vmatmul.bf16.gmra.mxu0 %v403
        %v438 = vpop.f32.mrf.mxu0
        %v439 = vadd.f32 %v381, %v438
        %v440 = vpop.f32.mrf.mxu0
        %v441 = vadd.f32 %v386, %v440
        %442 = vdwg.mxu0
        %443 = vmatpush.bf16.msra.mxu0 0
        %444 = vmatpush.bf16.msra.mxu0 0
        %445 = vmatpush.bf16.msra.mxu0 0
        %446 = vmatpush.bf16.msra.mxu0 0
        %447 = vmatpush.bf16.msra.mxu0 0
        %448 = vmatpush.bf16.msra.mxu0 0
        %449 = vmatpush.bf16.msra.mxu0 %v361
        %450 = vmatpush.bf16.msra.mxu0 %v357
        %451 = vmatmul.bf16.gmra.mxu0 %v400
        %v452 = vpop.f32.mrf.mxu0
        %v453 = vadd.f32 %v371, %v452
        %v454 = vpop.f32.mrf.mxu0
        %v455 = vadd.f32 %v376, %v454
        %456 = vmatmul.bf16.gmra.mxu0 %v403
        %v457 = vpop.f32.mrf.mxu0
        %v458 = vadd.f32 %v381, %v457
        %v459 = vpop.f32.mrf.mxu0
        %v460 = vadd.f32 %v386, %v459
        %461 = vdwg.mxu0
        %462 = vmatpush.bf16.msra.mxu0 0
        %463 = vmatpush.bf16.msra.mxu0 0
        %464 = vmatpush.bf16.msra.mxu0 0
        %465 = vmatpush.bf16.msra.mxu0 0
        %466 = vmatpush.bf16.msra.mxu0 0
        %467 = vmatpush.bf16.msra.mxu0 0
        %468 = vmatpush.bf16.msra.mxu0 %v362
        %469 = vmatpush.bf16.msra.mxu0 %v358
        %470 = vmatmul.bf16.gmra.mxu0 %v400
        %v471 = vpop.f32.mrf.mxu0
        %v472 = vadd.f32 %v371, %v471
        %v473 = vpop.f32.mrf.mxu0
        %v474 = vadd.f32 %v376, %v473
        %475 = vmatmul.bf16.gmra.mxu0 %v403
        %v476 = vpop.f32.mrf.mxu0
        %v477 = vadd.f32 %v381, %v476
        %v478 = vpop.f32.mrf.mxu0
        %v479 = vadd.f32 %v386, %v478
        %480 = vdwg.mxu0
        %v481 = vmax.f32 %v415, 0.0
        %v482 = vmax.f32 %v434, 0.0
        %v483 = vmax.f32 %v453, 0.0
        %v484 = vmax.f32 %v472, 0.0
        %v485 = vmax.f32 %v417, 0.0
        %v486 = vmax.f32 %v436, 0.0
        %v487 = vmax.f32 %v455, 0.0
        %v488 = vmax.f32 %v474, 0.0
        %v489 = vmax.f32 %v420, 0.0
        %v490 = vmax.f32 %v439, 0.0
        %v491 = vmax.f32 %v458, 0.0
        %v492 = vmax.f32 %v477, 0.0
        %v493 = vmax.f32 %v422, 0.0
        %v494 = vmax.f32 %v441, 0.0
        %v495 = vmax.f32 %v460, 0.0
        %v496 = vmax.f32 %v479, 0.0
        %s497 = scalar_lea.vmem %s1, 32
        %v498 = vld [vmem:[%s497] sm:$0xf]
        %v499 = vld [vmem:[%s497 + $0x4] sm:$0xf]
        %v500 = vld [vmem:[%s497 + $0x8] sm:$0xf]
        %v501 = vld [vmem:[%s497 + $0xc] sm:$0xf]
        %v502 = vpack.c.bf16 %v485, %v481
        %v503 = vpack.c.bf16 %v486, %v482
        %v504 = vpack.c.bf16 %v487, %v483
        %v505 = vpack.c.bf16 %v488, %v484
        %v506 = vpack.c.bf16 %v493, %v489
        %v507 = vpack.c.bf16 %v494, %v490
        %v508 = vpack.c.bf16 %v495, %v491
        %v509 = vpack.c.bf16 %v496, %v492
        %s510 = scalar_lea.vmem %s2, 64
        %v511 = vld [vmem:[%s510] sm:$0xff]
        %v512 = vld [vmem:[%s510 + $0x8] sm:$0xff]
        %v513 = vld [vmem:[%s510 + $0x10] sm:$0xff]
        %v514 = vld [vmem:[%s510 + $0x18] sm:$0xff]
        %516 = vset.pattern.permute.xlu0 0
        %517 = vperm.xlu0 %516, %v511
        %v518 = vpop.permute.xlu0 %517
        %521 = vset.pattern.permute.xlu0 0
        %522 = vperm.xlu0 %521, %v512
        %v523 = vpop.permute.xlu0 %522
        %526 = vset.pattern.permute.xlu0 0
        %527 = vperm.xlu0 %526, %v513
        %v528 = vpop.permute.xlu0 %527
        %531 = vset.pattern.permute.xlu0 0
        %532 = vperm.xlu0 %531, %v514
        %v533 = vpop.permute.xlu0 %532
        %v539 = vunpack.c.l.b16 %v498
        %v540 = vunpack.c.l.b16 %v499
        %v541 = vunpack.c.l.b16 %v500
        %v542 = vunpack.c.l.b16 %v501
        %v543 = vpack.c.b16 %v540, %v539
        %v544 = vpack.c.b16 %v542, %v541
        %v546 = vsel %vm398, %v543, 0
        %v549 = vsel %vm398, %v544, 0
        %551 = vmatpush.bf16.msra.mxu0 0
        %552 = vmatpush.bf16.msra.mxu0 0
        %553 = vmatpush.bf16.msra.mxu0 0
        %554 = vmatpush.bf16.msra.mxu0 0
        %555 = vmatpush.bf16.msra.mxu0 0
        %556 = vmatpush.bf16.msra.mxu0 0
        %557 = vmatpush.bf16.msra.mxu0 %v506
        %558 = vmatpush.bf16.msra.mxu0 %v502
        %559 = vmatmul.bf16.gmra.mxu0 %v546
        %v560 = vpop.f32.mrf.mxu0
        %v561 = vadd.f32 %v518, %v560
        %v562 = vpop.f32.mrf.mxu0
        %v563 = vadd.f32 %v523, %v562
        %564 = vmatmul.bf16.gmra.mxu0 %v549
        %v565 = vpop.f32.mrf.mxu0
        %v566 = vadd.f32 %v528, %v565
        %v567 = vpop.f32.mrf.mxu0
        %v568 = vadd.f32 %v533, %v567
        %569 = vdwg.mxu0
        %570 = vmatpush.bf16.msra.mxu0 0
        %571 = vmatpush.bf16.msra.mxu0 0
        %572 = vmatpush.bf16.msra.mxu0 0
        %573 = vmatpush.bf16.msra.mxu0 0
        %574 = vmatpush.bf16.msra.mxu0 0
        %575 = vmatpush.bf16.msra.mxu0 0
        %576 = vmatpush.bf16.msra.mxu0 %v507
        %577 = vmatpush.bf16.msra.mxu0 %v503
        %578 = vmatmul.bf16.gmra.mxu0 %v546
        %v579 = vpop.f32.mrf.mxu0
        %v580 = vadd.f32 %v518, %v579
        %v581 = vpop.f32.mrf.mxu0
        %v582 = vadd.f32 %v523, %v581
        %583 = vmatmul.bf16.gmra.mxu0 %v549
        %v584 = vpop.f32.mrf.mxu0
        %v585 = vadd.f32 %v528, %v584
        %v586 = vpop.f32.mrf.mxu0
        %v587 = vadd.f32 %v533, %v586
        %588 = vdwg.mxu0
        %589 = vmatpush.bf16.msra.mxu0 0
        %590 = vmatpush.bf16.msra.mxu0 0
        %591 = vmatpush.bf16.msra.mxu0 0
        %592 = vmatpush.bf16.msra.mxu0 0
        %593 = vmatpush.bf16.msra.mxu0 0
        %594 = vmatpush.bf16.msra.mxu0 0
        %595 = vmatpush.bf16.msra.mxu0 %v508
        %596 = vmatpush.bf16.msra.mxu0 %v504
        %597 = vmatmul.bf16.gmra.mxu0 %v546
        %v598 = vpop.f32.mrf.mxu0
        %v599 = vadd.f32 %v518, %v598
        %v600 = vpop.f32.mrf.mxu0
        %v601 = vadd.f32 %v523, %v600
        %602 = vmatmul.bf16.gmra.mxu0 %v549
        %v603 = vpop.f32.mrf.mxu0
        %v604 = vadd.f32 %v528, %v603
        %v605 = vpop.f32.mrf.mxu0
        %v606 = vadd.f32 %v533, %v605
        %607 = vdwg.mxu0
        %608 = vmatpush.bf16.msra.mxu0 0
        %609 = vmatpush.bf16.msra.mxu0 0
        %610 = vmatpush.bf16.msra.mxu0 0
        %611 = vmatpush.bf16.msra.mxu0 0
        %612 = vmatpush.bf16.msra.mxu0 0
        %613 = vmatpush.bf16.msra.mxu0 0
        %614 = vmatpush.bf16.msra.mxu0 %v509
        %615 = vmatpush.bf16.msra.mxu0 %v505
        %616 = vmatmul.bf16.gmra.mxu0 %v546
        %v617 = vpop.f32.mrf.mxu0
        %v618 = vadd.f32 %v518, %v617
        %v619 = vpop.f32.mrf.mxu0
        %v620 = vadd.f32 %v523, %v619
        %621 = vmatmul.bf16.gmra.mxu0 %v549
        %v622 = vpop.f32.mrf.mxu0
        %v623 = vadd.f32 %v528, %v622
        %v624 = vpop.f32.mrf.mxu0
        %v625 = vadd.f32 %v533, %v624
        %626 = vdwg.mxu0
        %v627 = vmax.f32 %v561, 0.0
        %v628 = vmax.f32 %v580, 0.0
        %v629 = vmax.f32 %v599, 0.0
        %v630 = vmax.f32 %v618, 0.0
        %v631 = vmax.f32 %v563, 0.0
        %v632 = vmax.f32 %v582, 0.0
        %v633 = vmax.f32 %v601, 0.0
        %v634 = vmax.f32 %v620, 0.0
        %v635 = vmax.f32 %v566, 0.0
        %v636 = vmax.f32 %v585, 0.0
        %v637 = vmax.f32 %v604, 0.0
        %v638 = vmax.f32 %v623, 0.0
        %v639 = vmax.f32 %v568, 0.0
        %v640 = vmax.f32 %v587, 0.0
        %v641 = vmax.f32 %v606, 0.0
        %v642 = vmax.f32 %v625, 0.0
        %v643 = vadd.f32 %v481, %v627
        %v644 = vadd.f32 %v482, %v628
        %v645 = vadd.f32 %v483, %v629
        %v646 = vadd.f32 %v484, %v630
        %v647 = vadd.f32 %v485, %v631
        %v648 = vadd.f32 %v486, %v632
        %v649 = vadd.f32 %v487, %v633
        %v650 = vadd.f32 %v488, %v634
        %v651 = vadd.f32 %v489, %v635
        %v652 = vadd.f32 %v490, %v636
        %v653 = vadd.f32 %v491, %v637
        %v654 = vadd.f32 %v492, %v638
        %v655 = vadd.f32 %v493, %v639
        %v656 = vadd.f32 %v494, %v640
        %v657 = vadd.f32 %v495, %v641
        %v658 = vadd.f32 %v496, %v642
        %s659 = scalar_lea.vmem %s1, 48
        %v660 = vld [vmem:[%s659] sm:$0xf]
        %v661 = vld [vmem:[%s659 + $0x4] sm:$0xf]
        %v662 = vld [vmem:[%s659 + $0x8] sm:$0xf]
        %v663 = vld [vmem:[%s659 + $0xc] sm:$0xf]
        %v664 = vpack.c.bf16 %v647, %v643
        %v665 = vpack.c.bf16 %v648, %v644
        %v666 = vpack.c.bf16 %v649, %v645
        %v667 = vpack.c.bf16 %v650, %v646
        %v668 = vpack.c.bf16 %v655, %v651
        %v669 = vpack.c.bf16 %v656, %v652
        %v670 = vpack.c.bf16 %v657, %v653
        %v671 = vpack.c.bf16 %v658, %v654
        %s672 = scalar_lea.vmem %s2, 96
        %v673 = vld [vmem:[%s672] sm:$0xff]
        %v674 = vld [vmem:[%s672 + $0x8] sm:$0xff]
        %v675 = vld [vmem:[%s672 + $0x10] sm:$0xff]
        %v676 = vld [vmem:[%s672 + $0x18] sm:$0xff]
        %678 = vset.pattern.permute.xlu0 0
        %679 = vperm.xlu0 %678, %v673
        %v680 = vpop.permute.xlu0 %679
        %683 = vset.pattern.permute.xlu0 0
        %684 = vperm.xlu0 %683, %v674
        %v685 = vpop.permute.xlu0 %684
        %688 = vset.pattern.permute.xlu0 0
        %689 = vperm.xlu0 %688, %v675
        %v690 = vpop.permute.xlu0 %689
        %693 = vset.pattern.permute.xlu0 0
        %694 = vperm.xlu0 %693, %v676
        %v695 = vpop.permute.xlu0 %694
        %v701 = vunpack.c.l.b16 %v660
        %v702 = vunpack.c.l.b16 %v661
        %v703 = vunpack.c.l.b16 %v662
        %v704 = vunpack.c.l.b16 %v663
        %v705 = vpack.c.b16 %v702, %v701
        %v706 = vpack.c.b16 %v704, %v703
        %v708 = vsel %vm398, %v705, 0
        %v711 = vsel %vm398, %v706, 0
        %713 = vmatpush.bf16.msra.mxu0 0
        %714 = vmatpush.bf16.msra.mxu0 0
        %715 = vmatpush.bf16.msra.mxu0 0
        %716 = vmatpush.bf16.msra.mxu0 0
        %717 = vmatpush.bf16.msra.mxu0 0
        %718 = vmatpush.bf16.msra.mxu0 0
        %719 = vmatpush.bf16.msra.mxu0 %v668
        %720 = vmatpush.bf16.msra.mxu0 %v664
        %721 = vmatmul.bf16.gmra.mxu0 %v708
        %v722 = vpop.f32.mrf.mxu0
        %v723 = vadd.f32 %v680, %v722
        %v724 = vpop.f32.mrf.mxu0
        %v725 = vadd.f32 %v685, %v724
        %726 = vmatmul.bf16.gmra.mxu0 %v711
        %v727 = vpop.f32.mrf.mxu0
        %v728 = vadd.f32 %v690, %v727
        %v729 = vpop.f32.mrf.mxu0
        %v730 = vadd.f32 %v695, %v729
        %731 = vdwg.mxu0
        %732 = vmatpush.bf16.msra.mxu0 0
        %733 = vmatpush.bf16.msra.mxu0 0
        %734 = vmatpush.bf16.msra.mxu0 0
        %735 = vmatpush.bf16.msra.mxu0 0
        %736 = vmatpush.bf16.msra.mxu0 0
        %737 = vmatpush.bf16.msra.mxu0 0
        %738 = vmatpush.bf16.msra.mxu0 %v669
        %739 = vmatpush.bf16.msra.mxu0 %v665
        %740 = vmatmul.bf16.gmra.mxu0 %v708
        %v741 = vpop.f32.mrf.mxu0
        %v742 = vadd.f32 %v680, %v741
        %v743 = vpop.f32.mrf.mxu0
        %v744 = vadd.f32 %v685, %v743
        %745 = vmatmul.bf16.gmra.mxu0 %v711
        %v746 = vpop.f32.mrf.mxu0
        %v747 = vadd.f32 %v690, %v746
        %v748 = vpop.f32.mrf.mxu0
        %v749 = vadd.f32 %v695, %v748
        %750 = vdwg.mxu0
        %751 = vmatpush.bf16.msra.mxu0 0
        %752 = vmatpush.bf16.msra.mxu0 0
        %753 = vmatpush.bf16.msra.mxu0 0
        %754 = vmatpush.bf16.msra.mxu0 0
        %755 = vmatpush.bf16.msra.mxu0 0
        %756 = vmatpush.bf16.msra.mxu0 0
        %757 = vmatpush.bf16.msra.mxu0 %v670
        %758 = vmatpush.bf16.msra.mxu0 %v666
        %759 = vmatmul.bf16.gmra.mxu0 %v708
        %v760 = vpop.f32.mrf.mxu0
        %v761 = vadd.f32 %v680, %v760
        %v762 = vpop.f32.mrf.mxu0
        %v763 = vadd.f32 %v685, %v762
        %764 = vmatmul.bf16.gmra.mxu0 %v711
        %v765 = vpop.f32.mrf.mxu0
        %v766 = vadd.f32 %v690, %v765
        %v767 = vpop.f32.mrf.mxu0
        %v768 = vadd.f32 %v695, %v767
        %769 = vdwg.mxu0
        %770 = vmatpush.bf16.msra.mxu0 0
        %771 = vmatpush.bf16.msra.mxu0 0
        %772 = vmatpush.bf16.msra.mxu0 0
        %773 = vmatpush.bf16.msra.mxu0 0
        %774 = vmatpush.bf16.msra.mxu0 0
        %775 = vmatpush.bf16.msra.mxu0 0
        %776 = vmatpush.bf16.msra.mxu0 %v671
        %777 = vmatpush.bf16.msra.mxu0 %v667
        %778 = vmatmul.bf16.gmra.mxu0 %v708
        %v779 = vpop.f32.mrf.mxu0
        %v780 = vadd.f32 %v680, %v779
        %v781 = vpop.f32.mrf.mxu0
        %v782 = vadd.f32 %v685, %v781
        %783 = vmatmul.bf16.gmra.mxu0 %v711
        %v784 = vpop.f32.mrf.mxu0
        %v785 = vadd.f32 %v690, %v784
        %v786 = vpop.f32.mrf.mxu0
        %v787 = vadd.f32 %v695, %v786
        %788 = vdwg.mxu0
        %v789 = vmax.f32 %v723, 0.0
        %v790 = vmax.f32 %v742, 0.0
        %v791 = vmax.f32 %v761, 0.0
        %v792 = vmax.f32 %v780, 0.0
        %v793 = vmax.f32 %v725, 0.0
        %v794 = vmax.f32 %v744, 0.0
        %v795 = vmax.f32 %v763, 0.0
        %v796 = vmax.f32 %v782, 0.0
        %v797 = vmax.f32 %v728, 0.0
        %v798 = vmax.f32 %v747, 0.0
        %v799 = vmax.f32 %v766, 0.0
        %v800 = vmax.f32 %v785, 0.0
        %v801 = vmax.f32 %v730, 0.0
        %v802 = vmax.f32 %v749, 0.0
        %v803 = vmax.f32 %v768, 0.0
        %v804 = vmax.f32 %v787, 0.0
        %s805 = scalar_lea.vmem %s1, 64
        %v806 = vld [vmem:[%s805] sm:$0xf]
        %v807 = vld [vmem:[%s805 + $0x4] sm:$0xf]
        %v808 = vld [vmem:[%s805 + $0x8] sm:$0xf]
        %v809 = vld [vmem:[%s805 + $0xc] sm:$0xf]
        %v810 = vpack.c.bf16 %v793, %v789
        %v811 = vpack.c.bf16 %v794, %v790
        %v812 = vpack.c.bf16 %v795, %v791
        %v813 = vpack.c.bf16 %v796, %v792
        %v814 = vpack.c.bf16 %v801, %v797
        %v815 = vpack.c.bf16 %v802, %v798
        %v816 = vpack.c.bf16 %v803, %v799
        %v817 = vpack.c.bf16 %v804, %v800
        %s818 = scalar_lea.vmem %s2, 128
        %v819 = vld [vmem:[%s818] sm:$0xff]
        %v820 = vld [vmem:[%s818 + $0x8] sm:$0xff]
        %v821 = vld [vmem:[%s818 + $0x10] sm:$0xff]
        %v822 = vld [vmem:[%s818 + $0x18] sm:$0xff]
        %824 = vset.pattern.permute.xlu0 0
        %825 = vperm.xlu0 %824, %v819
        %v826 = vpop.permute.xlu0 %825
        %829 = vset.pattern.permute.xlu0 0
        %830 = vperm.xlu0 %829, %v820
        %v831 = vpop.permute.xlu0 %830
        %833 = vset.pattern.permute.xlu0 0
        %834 = vperm.xlu0 %833, %v821
        %v835 = vpop.permute.xlu0 %834
        %837 = vset.pattern.permute.xlu0 0
        %838 = vperm.xlu0 %837, %v822
        %v839 = vpop.permute.xlu0 %838
        %v844 = vunpack.c.l.b16 %v806
        %v845 = vunpack.c.l.b16 %v807
        %v846 = vunpack.c.l.b16 %v808
        %v847 = vunpack.c.l.b16 %v809
        %v848 = vpack.c.b16 %v845, %v844
        %v849 = vpack.c.b16 %v847, %v846
        %v851 = vsel %vm398, %v848, 0
        %v854 = vsel %vm398, %v849, 0
        %856 = vmatpush.bf16.msra.mxu0 0
        %857 = vmatpush.bf16.msra.mxu0 0
        %858 = vmatpush.bf16.msra.mxu0 0
        %859 = vmatpush.bf16.msra.mxu0 0
        %860 = vmatpush.bf16.msra.mxu0 0
        %861 = vmatpush.bf16.msra.mxu0 0
        %862 = vmatpush.bf16.msra.mxu0 %v814
        %863 = vmatpush.bf16.msra.mxu0 %v810
        %864 = vmatmul.bf16.gmra.mxu0 %v851
        %v865 = vpop.f32.mrf.mxu0
        %v866 = vadd.f32 %v826, %v865
        %v867 = vpop.f32.mrf.mxu0
        %868 = vmatmul.bf16.gmra.mxu0 %v854
        %v869 = vpop.f32.mrf.mxu0
        %v870 = vpop.f32.mrf.mxu0
        %871 = vdwg.mxu0
        %872 = vmatpush.bf16.msra.mxu0 0
        %873 = vmatpush.bf16.msra.mxu0 0
        %874 = vmatpush.bf16.msra.mxu0 0
        %875 = vmatpush.bf16.msra.mxu0 0
        %876 = vmatpush.bf16.msra.mxu0 0
        %877 = vmatpush.bf16.msra.mxu0 0
        %878 = vmatpush.bf16.msra.mxu0 %v815
        %879 = vmatpush.bf16.msra.mxu0 %v811
        %880 = vmatmul.bf16.gmra.mxu0 %v851
        %v881 = vpop.f32.mrf.mxu0
        %v882 = vadd.f32 %v826, %v881
        %v883 = vpop.f32.mrf.mxu0
        %884 = vmatmul.bf16.gmra.mxu0 %v854
        %v885 = vpop.f32.mrf.mxu0
        %v886 = vpop.f32.mrf.mxu0
        %887 = vdwg.mxu0
        %888 = vmatpush.bf16.msra.mxu0 0
        %889 = vmatpush.bf16.msra.mxu0 0
        %890 = vmatpush.bf16.msra.mxu0 0
        %891 = vmatpush.bf16.msra.mxu0 0
        %892 = vmatpush.bf16.msra.mxu0 0
        %893 = vmatpush.bf16.msra.mxu0 0
        %894 = vmatpush.bf16.msra.mxu0 %v816
        %895 = vmatpush.bf16.msra.mxu0 %v812
        %896 = vmatmul.bf16.gmra.mxu0 %v851
        %v897 = vpop.f32.mrf.mxu0
        %v898 = vadd.f32 %v826, %v897
        %v899 = vpop.f32.mrf.mxu0
        %900 = vmatmul.bf16.gmra.mxu0 %v854
        %v901 = vpop.f32.mrf.mxu0
        %v902 = vpop.f32.mrf.mxu0
        %903 = vdwg.mxu0
        %904 = vmatpush.bf16.msra.mxu0 0
        %905 = vmatpush.bf16.msra.mxu0 0
        %906 = vmatpush.bf16.msra.mxu0 0
        %907 = vmatpush.bf16.msra.mxu0 0
        %908 = vmatpush.bf16.msra.mxu0 0
        %909 = vmatpush.bf16.msra.mxu0 0
        %910 = vmatpush.bf16.msra.mxu0 %v817
        %911 = vmatpush.bf16.msra.mxu0 %v813
        %912 = vmatmul.bf16.gmra.mxu0 %v851
        %v913 = vpop.f32.mrf.mxu0
        %v914 = vadd.f32 %v826, %v913
        %v915 = vpop.f32.mrf.mxu0
        %916 = vmatmul.bf16.gmra.mxu0 %v854
        %v917 = vpop.f32.mrf.mxu0
        %v918 = vpop.f32.mrf.mxu0
        %919 = vdwg.mxu0
        %920 = vst [vmem:[%s188] sm:$0xff] %v866
        %921 = vst [vmem:[%s188 + $0x8] sm:$0xff] %v882
        %922 = vst [vmem:[%s188 + $0x10] sm:$0xff] %v898
        %923 = vst [vmem:[%s188 + $0x18] sm:$0xff] %v914
        %s924 = sand.u32 %s96, 1
        %s925 = scalar_lea.sflag [#allocation4], %s924
        %s926 = sand.u32 %s96, 1
        %s927 = smul.addr %s926, 32
        %s928 = scalar_lea.vmem [#allocation5], %s927
        // Predicated region
        $region37: #{tpu_custom_call.1} parent=31 // pred_check
          %p929 = pneg %p106
        $region38: #{tpu_custom_call.1} parent=31 // pred_check_branch
          %931 = sbr.rel (%p929) target = $region40
        $region39: #{tpu_custom_call.1} parent=31 // pred_region
          %s932 = smul.u32 4, %s20
          %934 = vsyncadd %s925, 0
          %s935 = smul.addr %s932, 8
          %s936 = scalar_lea.hbm %s3, %s935
          %s938 = sshll.u32 %s928, 4
          %s939 = int_to_ptr.vmem [resolvable:$true] %s938
          %s940 = sshll.u32 %s936, 4
          %s941 = int_to_ptr.hbm [resolvable:$true] %s940
          %943 = dma.vmem_to_hbm [thread:$0]  %s939, 512, %s941, %s925
        $region40: #{tpu_custom_call.1} parent=31 // pred_fallthru
          _
      $region32: #{tpu_custom_call.1} parent=5 // pred_fallthru
        _
      %p944 = scmp.le.s32.totalorder 2, %s15
      // Predicated region
      $region41: #{tpu_custom_call.1} parent=5 // pred_check
        %p945 = pneg %p944
      $region42: #{tpu_custom_call.1} parent=5 // pred_check_branch
        %947 = sbr.rel (%p945) target = $region44
      $region43: #{tpu_custom_call.1} parent=5 // pred_region
        %s948 = ssub.s32 %s15, 2
        // Predicated region
        $region45: #{tpu_custom_call.1} parent=43 // pred_check
          %p949 = pneg %p112
        $region46: #{tpu_custom_call.1} parent=43 // pred_check_branch
          %951 = sbr.rel (%p949) target = $region48
        $region47: #{tpu_custom_call.1} parent=43 // pred_region
          %s952 = sand.u32 %s97, 1
          %s953 = scalar_lea.sflag [#allocation4], %s952
          %s954 = sand.u32 %s97, 1
          %s955 = smul.addr %s954, 32
          %s956 = scalar_lea.vmem [#allocation5], %s955
          %958 = dma.done %s953, 512
        $region48: #{tpu_custom_call.1} parent=43 // pred_fallthru
          _
      $region44: #{tpu_custom_call.1} parent=5 // pred_fallthru
        _
    $region6: #{tpu_custom_call.1} parent=1 // loop_footer
      %s19 = sadd.s32 1, %s15
    $region7: #{tpu_custom_call.1} parent=1 // loop_footer_branch
      %14 = sbr.rel target = $region3
    $region8: #{tpu_custom_call.1} parent=1 // loop_exit
      _
    %959 = vsyncpa [#allocation3], 1
    %s960 = scalar_lea.sflag [#allocation3], 1
    %961 = vsyncpa %s960, 1
    %962 = vsyncpa [#allocation4], 1
    %s963 = scalar_lea.sflag [#allocation4], 1
    %964 = vsyncpa %s963, 1

</llo_original>
